<compile_context>
chip_gen: v5e
topology: v5e:2x2
jax: 0.10.0
libtpu: 0.0.40
codegen_flags: <defaults>
</compile_context>

<pallas_src>
import math

import jax
import jax.numpy as jnp
import numpy as np
from jax.experimental import pallas as pl
from jax.experimental.pallas import tpu as pltpu

_SQRT_2_OVER_PI = math.sqrt(2.0 / math.pi)
_SUBLANE = 8


def _gelu_tanh(x):
    # Matches the custom `gelu` in the reference module (tanh approximation).
    return 0.5 * x * (1.0 + jnp.tanh(_SQRT_2_OVER_PI * (x + 0.044715 * x * x * x)))


def _round_up(v, m):
    return ((v + m - 1) // m) * m


def _make_mlp_kernel(num_linear, use_bf16_matmul):
    """Kernel over one row tile: refs = (x, w0, b0, w1, b1, ..., wL, bL, out)."""

    def kernel(*refs):
        x_ref = refs[0]
        out_ref = refs[-1]
        params = refs[1:-1]

        h = x_ref[...]                                   # (tm, d0) f32
        for l in range(num_linear):
            w = params[2 * l][...]                       # bf16 or f32 (wrapper-cast)
            b = params[2 * l + 1][...]                   # (1, d_out) f32
            lhs = h.astype(jnp.bfloat16) if use_bf16_matmul else h
            h = jnp.dot(lhs, w, preferred_element_type=jnp.float32) + b
            if l < num_linear - 1:
                h = _gelu_tanh(h)
        out_ref[...] = h.astype(out_ref.dtype)

    return kernel


def _vmem_capacity_bytes():
    try:
        return int(pltpu.get_tpu_info().vmem_capacity_bytes)
    except Exception:
        return 128 << 20  # conservative default (v5e/v6e physical VMEM)


def mlp_forward(x, weights, biases, *, block_rows=1024, use_bf16_matmul=True,
                out_dtype=jnp.float32):
    """Fused MLP forward.

    x       : (..., input_size) float array
    weights : list of (n_in, n_out) arrays (already transposed vs torch Linear)
    biases  : list of (n_out,) arrays
    Returns (..., output_size) in `out_dtype` (f32 default; pass bf16 to halve
    output HBM traffic when downstream tolerates it).
    """
    num_linear = len(weights)
    dims = [weights[0].shape[0]] + [w.shape[1] for w in weights]
    out_dim = dims[-1]

    orig_shape = x.shape
    x2d = x.reshape(-1, dims[0]).astype(jnp.float32)
    n = x2d.shape[0]

    # ---- parameters: pre-cast weights to bf16 in the wrapper (perf review #1) --
    w_dtype = jnp.bfloat16 if use_bf16_matmul else jnp.float32
    w_p = [w.astype(w_dtype) for w in weights]
    b_p = [b.reshape(1, -1).astype(jnp.float32) for b in biases]

    # ---- generation-aware VMEM budget ------------------------------------------
    vmem_cap = _vmem_capacity_bytes()
    vmem_usable = int(vmem_cap * 0.85)   # headroom for compiler scratch/semaphores
    vmem_budget = int(vmem_cap * 0.70)   # target working set when sizing the tile

    w_itemsize = 2 if use_bf16_matmul else 4
    param_bytes = (sum(dims[l] * dims[l + 1] for l in range(num_linear)) * w_itemsize
                   + sum(dims[1:]) * 4)

    def working_set(tm):
        io = 4 * 2 * tm * (dims[0] + dims[-1])   # double-buffered x / out tiles (f32)
        act = 4 * 2 * tm * max(dims)             # in-flight f32 activations (rough)
        return io + act + param_bytes            # params are single-buffered

    if working_set(_SUBLANE) > vmem_usable:
        # TODO(synk): add a K/N-tiled fallback for MLPs whose parameter stack does
        # not fit VMEM; qagnn's sizes are far below this limit.
        raise ValueError(
            f"MLP parameters (~{param_bytes / 2**20:.1f} MiB) do not fit the VMEM "
            f"budget ({vmem_usable / 2**20:.1f} MiB); K/N tiling not implemented.")

    # ---- row tiling --------------------------------------------------------------
    n_aligned = _round_up(max(n, 1), _SUBLANE)
    tm = min(_round_up(block_rows, _SUBLANE), n_aligned)
    if n_aligned >= 2 * _SUBLANE:
        # Guarantee >= 2 grid steps so both v7x TensorCores get work.
        tm = min(tm, _round_up(-(-n_aligned // 2), _SUBLANE))
    while tm > _SUBLANE and working_set(tm) > vmem_budget:
        tm = _round_up(tm // 2, _SUBLANE)
    n_pad = _round_up(n_aligned, tm)
    grid = (n_pad // tm,)

    if n_pad > n:
        x2d = jnp.pad(x2d, ((0, n_pad - n), (0, 0)))  # rows only; features unpadded

    # ---- specs --------------------------------------------------------------------
    def make_specs(single_buffer_params):
        pkw = {"pipeline_mode": pl.Buffered(1)} if single_buffer_params else {}
        in_specs = [pl.BlockSpec((tm, dims[0]), lambda i: (i, 0))]
        for l in range(num_linear):
            in_specs.append(
                pl.BlockSpec((dims[l], dims[l + 1]), lambda i: (0, 0), **pkw))
            in_specs.append(
                pl.BlockSpec((1, dims[l + 1]), lambda i: (0, 0), **pkw))
        out_spec = pl.BlockSpec((tm, dims[-1]), lambda i: (i, 0))
        return in_specs, out_spec

    # ---- scheduling hints -----------------------------------------------------------
    flops = 2 * n_pad * sum(dims[l] * dims[l + 1] for l in range(num_linear))
    transcendentals = n_pad * sum(dims[1:-1])
    bytes_accessed = 4 * n_pad * (dims[0] + dims[-1]) + param_bytes
    vmem_limit = int(min(max(int(working_set(tm) * 1.5), 32 << 20), vmem_usable))

    flat_params = [a for pair in zip(w_p, b_p) for a in pair]
    kernel = _make_mlp_kernel(num_linear, use_bf16_matmul)

    def run(single_buffer_params):
        in_specs, out_spec = make_specs(single_buffer_params)
        return pl.pallas_call(
            kernel,
            out_shape=jax.ShapeDtypeStruct((n_pad, dims[-1]), out_dtype),
            grid=grid,
            in_specs=in_specs,
            out_specs=out_spec,
            compiler_params=pltpu.CompilerParams(
                dimension_semantics=("parallel",),
                vmem_limit_bytes=vmem_limit,
            ),
            cost_estimate=pl.CostEstimate(
                flops=int(flops),
                transcendentals=int(transcendentals),
                bytes_accessed=int(bytes_accessed),
            ),
        )(x2d, *flat_params)

    try:
        out = run(True)           # single-buffered resident params (Buffered(1))
    except Exception:
        out = run(False)          # fallback: default double-buffered params

    if n_pad > n:
        out = out[:n]
    return out.reshape(*orig_shape[:-1], out_dim)


def _reference_forward(x, weights, biases):
    # Pure-JAX reference mirroring the PyTorch forward (eval mode, gelu-tanh).
    h = x.astype(jnp.float32)
    for l in range(len(weights)):
        h = h @ weights[l].astype(jnp.float32) + biases[l].astype(jnp.float32)
        if l < len(weights) - 1:
            h = _gelu_tanh(h)
    return h


# TODO(synk): train-mode Dropout, batch_norm=True and layer_norm=True branches are
# not implemented; this kernel covers the module defaults (eval, no normalization).

if __name__ == "__main__":
    # Small shapes consistent with the module.
    input_size = 32
    hidden_size = 64
    output_size = 32
    num_layers = 2          # -> 3 Linear layers with GELU between
    bz, seq = 2, 8          # leading dims; flattened to N = 16 rows

    key = jax.random.PRNGKey(0)
    keys = jax.random.split(key, 2 * (num_layers + 1) + 1)

    weights, biases = [], []
    for i in range(num_layers + 1):
        n_in = input_size if i == 0 else hidden_size
        n_out = hidden_size if i < num_layers else output_size
        lim = 1.0 / math.sqrt(n_in)  # torch.nn.Linear default init
        weights.append(jax.random.uniform(keys[2 * i], (n_in, n_out),
                                          minval=-lim, maxval=lim, dtype=jnp.float32))
        biases.append(jax.random.uniform(keys[2 * i + 1], (n_out,),
                                         minval=-lim, maxval=lim, dtype=jnp.float32))

    x = jax.random.normal(keys[-1], (bz, seq, input_size), dtype=jnp.float32)
    ref = np.asarray(_reference_forward(x, weights, biases))

    # Exact-path check (f32 MXU operands) against the pure-JAX reference.
    out_f32 = jax.block_until_ready(
        mlp_forward(x, weights, biases, use_bf16_matmul=False))
    np.testing.assert_allclose(np.asarray(out_f32), ref, rtol=1e-4, atol=1e-4)

    # Production default: bf16 MXU operands with f32 accumulation.
    out_bf16 = jax.block_until_ready(mlp_forward(x, weights, biases))
    np.testing.assert_allclose(np.asarray(out_bf16), ref, rtol=5e-2, atol=5e-2)

    assert out_bf16.shape == (bz, seq, output_size), out_bf16.shape
    print("KERNEL_OK")
</pallas_src>

<mosaic_0001>
module attributes {stable_mosaic.version = 11 : i64} {
  func.func @kernel(%arg0: i32, %arg1: memref<8x32xf32, #tpu.memory_space<vmem>>, %arg2: memref<32x64xf32, #tpu.memory_space<vmem>>, %arg3: memref<1x64xf32, #tpu.memory_space<vmem>>, %arg4: memref<64x64xf32, #tpu.memory_space<vmem>>, %arg5: memref<1x64xf32, #tpu.memory_space<vmem>>, %arg6: memref<64x32xf32, #tpu.memory_space<vmem>>, %arg7: memref<1x32xf32, #tpu.memory_space<vmem>>, %arg8: memref<8x32xf32, #tpu.memory_space<vmem>>) attributes {dimension_semantics = [#tpu.dimension_semantics<parallel>], iteration_bounds = array<i64: 2>, scalar_prefetch = 0 : i64, scratch_operands = 0 : i64, tpu.core_type = #tpu.core_type<tc>, window_params = [{transform_indices = @transform_0, window_bounds = array<i64: 8, 32>}, {pipeline_mode = #tpu.pipeline_mode<synchronous>, transform_indices = @transform_1, window_bounds = array<i64: 32, 64>}, {pipeline_mode = #tpu.pipeline_mode<synchronous>, transform_indices = @transform_2, window_bounds = array<i64: 1, 64>}, {pipeline_mode = #tpu.pipeline_mode<synchronous>, transform_indices = @transform_3, window_bounds = array<i64: 64, 64>}, {pipeline_mode = #tpu.pipeline_mode<synchronous>, transform_indices = @transform_4, window_bounds = array<i64: 1, 64>}, {pipeline_mode = #tpu.pipeline_mode<synchronous>, transform_indices = @transform_5, window_bounds = array<i64: 64, 32>}, {pipeline_mode = #tpu.pipeline_mode<synchronous>, transform_indices = @transform_6, window_bounds = array<i64: 1, 32>}, {transform_indices = @transform_7, window_bounds = array<i64: 8, 32>}]} {
    %c0 = arith.constant 0 : index
    %c0_0 = arith.constant 0 : index
    %0 = vector.load %arg1[%c0, %c0_0] : memref<8x32xf32, #tpu.memory_space<vmem>>, vector<8x32xf32>
    %c0_1 = arith.constant 0 : index
    %c0_2 = arith.constant 0 : index
    %1 = vector.load %arg2[%c0_1, %c0_2] : memref<32x64xf32, #tpu.memory_space<vmem>>, vector<32x64xf32>
    %c0_3 = arith.constant 0 : index
    %c0_4 = arith.constant 0 : index
    %2 = vector.load %arg3[%c0_3, %c0_4] : memref<1x64xf32, #tpu.memory_space<vmem>>, vector<1x64xf32>
    %cst = arith.constant dense<0.000000e+00> : vector<8x64xf32>
    %3 = tpu.matmul %0, %1, %cst {dimension_numbers = #tpu.dot_dimension_numbers<[1], [0], [0], [1], [0, 0, 1, 1], [], []>} : vector<8x32xf32>, vector<32x64xf32>, vector<8x64xf32> -> vector<8x64xf32>
    %4 = vector.broadcast %2 : vector<1x64xf32> to vector<8x64xf32>
    %5 = arith.addf %3, %4 : vector<8x64xf32>
    %cst_5 = arith.constant 5.000000e-01 : f32
    %6 = vector.broadcast %cst_5 : f32 to vector<8x64xf32>
    %7 = arith.mulf %6, %5 : vector<8x64xf32>
    %cst_6 = arith.constant 4.471500e-02 : f32
    %8 = vector.broadcast %cst_6 : f32 to vector<8x64xf32>
    %9 = arith.mulf %8, %5 : vector<8x64xf32>
    %10 = arith.mulf %9, %5 : vector<8x64xf32>
    %11 = arith.mulf %10, %5 : vector<8x64xf32>
    %12 = arith.addf %5, %11 : vector<8x64xf32>
    %cst_7 = arith.constant 0.797884583 : f32
    %13 = vector.broadcast %cst_7 : f32 to vector<8x64xf32>
    %14 = arith.mulf %13, %12 : vector<8x64xf32>
    %15 = math.tanh %14 : vector<8x64xf32>
    %cst_8 = arith.constant 1.000000e+00 : f32
    %16 = vector.broadcast %cst_8 : f32 to vector<8x64xf32>
    %17 = arith.addf %16, %15 : vector<8x64xf32>
    %18 = arith.mulf %7, %17 : vector<8x64xf32>
    %c0_9 = arith.constant 0 : index
    %c0_10 = arith.constant 0 : index
    %19 = vector.load %arg4[%c0_9, %c0_10] : memref<64x64xf32, #tpu.memory_space<vmem>>, vector<64x64xf32>
    %c0_11 = arith.constant 0 : index
    %c0_12 = arith.constant 0 : index
    %20 = vector.load %arg5[%c0_11, %c0_12] : memref<1x64xf32, #tpu.memory_space<vmem>>, vector<1x64xf32>
    %cst_13 = arith.constant dense<0.000000e+00> : vector<8x64xf32>
    %21 = tpu.matmul %18, %19, %cst_13 {dimension_numbers = #tpu.dot_dimension_numbers<[1], [0], [0], [1], [0, 0, 1, 1], [], []>} : vector<8x64xf32>, vector<64x64xf32>, vector<8x64xf32> -> vector<8x64xf32>
    %22 = vector.broadcast %20 : vector<1x64xf32> to vector<8x64xf32>
    %23 = arith.addf %21, %22 : vector<8x64xf32>
    %cst_14 = arith.constant 5.000000e-01 : f32
    %24 = vector.broadcast %cst_14 : f32 to vector<8x64xf32>
    %25 = arith.mulf %24, %23 : vector<8x64xf32>
    %cst_15 = arith.constant 4.471500e-02 : f32
    %26 = vector.broadcast %cst_15 : f32 to vector<8x64xf32>
    %27 = arith.mulf %26, %23 : vector<8x64xf32>
    %28 = arith.mulf %27, %23 : vector<8x64xf32>
    %29 = arith.mulf %28, %23 : vector<8x64xf32>
    %30 = arith.addf %23, %29 : vector<8x64xf32>
    %cst_16 = arith.constant 0.797884583 : f32
    %31 = vector.broadcast %cst_16 : f32 to vector<8x64xf32>
    %32 = arith.mulf %31, %30 : vector<8x64xf32>
    %33 = math.tanh %32 : vector<8x64xf32>
    %cst_17 = arith.constant 1.000000e+00 : f32
    %34 = vector.broadcast %cst_17 : f32 to vector<8x64xf32>
    %35 = arith.addf %34, %33 : vector<8x64xf32>
    %36 = arith.mulf %25, %35 : vector<8x64xf32>
    %c0_18 = arith.constant 0 : index
    %c0_19 = arith.constant 0 : index
    %37 = vector.load %arg6[%c0_18, %c0_19] : memref<64x32xf32, #tpu.memory_space<vmem>>, vector<64x32xf32>
    %c0_20 = arith.constant 0 : index
    %c0_21 = arith.constant 0 : index
    %38 = vector.load %arg7[%c0_20, %c0_21] : memref<1x32xf32, #tpu.memory_space<vmem>>, vector<1x32xf32>
    %cst_22 = arith.constant dense<0.000000e+00> : vector<8x32xf32>
    %39 = tpu.matmul %36, %37, %cst_22 {dimension_numbers = #tpu.dot_dimension_numbers<[1], [0], [0], [1], [0, 0, 1, 1], [], []>} : vector<8x64xf32>, vector<64x32xf32>, vector<8x32xf32> -> vector<8x32xf32>
    %40 = vector.broadcast %38 : vector<1x32xf32> to vector<8x32xf32>
    %41 = arith.addf %39, %40 : vector<8x32xf32>
    %c0_23 = arith.constant 0 : index
    %c0_24 = arith.constant 0 : index
    %42 = vector.load %arg8[%c0_23, %c0_24] : memref<8x32xf32, #tpu.memory_space<vmem>>, vector<8x32xf32>
    tpu.vector_store %arg8[%c0_23, %c0_24], %41 {strides = array<i32>} : memref<8x32xf32, #tpu.memory_space<vmem>>, vector<8x32xf32>,
    return
  }
  func.func @transform_0(%arg0: i32) -> (i32, i32) {
    %c0_i32 = arith.constant 0 : i32
    %c0_i32_0 = arith.constant 0 : i32
    return %arg0, %c0_i32 : i32, i32
  }
  func.func @transform_1(%arg0: i32) -> (i32, i32) {
    %c0_i32 = arith.constant 0 : i32
    %c0_i32_0 = arith.constant 0 : i32
    %c0_i32_1 = arith.constant 0 : i32
    return %c0_i32, %c0_i32_0 : i32, i32
  }
  func.func @transform_2(%arg0: i32) -> (i32, i32) {
    %c0_i32 = arith.constant 0 : i32
    %c0_i32_0 = arith.constant 0 : i32
    %c0_i32_1 = arith.constant 0 : i32
    return %c0_i32, %c0_i32_0 : i32, i32
  }
  func.func @transform_3(%arg0: i32) -> (i32, i32) {
    %c0_i32 = arith.constant 0 : i32
    %c0_i32_0 = arith.constant 0 : i32
    %c0_i32_1 = arith.constant 0 : i32
    return %c0_i32, %c0_i32_0 : i32, i32
  }
  func.func @transform_4(%arg0: i32) -> (i32, i32) {
    %c0_i32 = arith.constant 0 : i32
    %c0_i32_0 = arith.constant 0 : i32
    %c0_i32_1 = arith.constant 0 : i32
    return %c0_i32, %c0_i32_0 : i32, i32
  }
  func.func @transform_5(%arg0: i32) -> (i32, i32) {
    %c0_i32 = arith.constant 0 : i32
    %c0_i32_0 = arith.constant 0 : i32
    %c0_i32_1 = arith.constant 0 : i32
    return %c0_i32, %c0_i32_0 : i32, i32
  }
  func.func @transform_6(%arg0: i32) -> (i32, i32) {
    %c0_i32 = arith.constant 0 : i32
    %c0_i32_0 = arith.constant 0 : i32
    %c0_i32_1 = arith.constant 0 : i32
    return %c0_i32, %c0_i32_0 : i32, i32
  }
  func.func @transform_7(%arg0: i32) -> (i32, i32) {
    %c0_i32 = arith.constant 0 : i32
    %c0_i32_0 = arith.constant 0 : i32
    return %arg0, %c0_i32 : i32, i32
  }
}

module attributes {stable_mosaic.version = 11 : i64} {
  func.func @kernel(%arg0: i32, %arg1: memref<8x32xf32, #tpu.memory_space<vmem>>, %arg2: memref<32x64xf32, #tpu.memory_space<vmem>>, %arg3: memref<1x64xf32, #tpu.memory_space<vmem>>, %arg4: memref<64x64xf32, #tpu.memory_space<vmem>>, %arg5: memref<1x64xf32, #tpu.memory_space<vmem>>, %arg6: memref<64x32xf32, #tpu.memory_space<vmem>>, %arg7: memref<1x32xf32, #tpu.memory_space<vmem>>, %arg8: memref<8x32xf32, #tpu.memory_space<vmem>>) attributes {dimension_semantics = [#tpu.dimension_semantics<parallel>], iteration_bounds = array<i64: 2>, scalar_prefetch = 0 : i64, scratch_operands = 0 : i64, tpu.core_type = #tpu.core_type<tc>, window_params = [{transform_indices = @transform_0, window_bounds = array<i64: 8, 32>}, {pipeline_mode = #tpu.pipeline_mode<synchronous>, transform_indices = @transform_1, window_bounds = array<i64: 32, 64>}, {pipeline_mode = #tpu.pipeline_mode<synchronous>, transform_indices = @transform_2, window_bounds = array<i64: 1, 64>}, {pipeline_mode = #tpu.pipeline_mode<synchronous>, transform_indices = @transform_3, window_bounds = array<i64: 64, 64>}, {pipeline_mode = #tpu.pipeline_mode<synchronous>, transform_indices = @transform_4, window_bounds = array<i64: 1, 64>}, {pipeline_mode = #tpu.pipeline_mode<synchronous>, transform_indices = @transform_5, window_bounds = array<i64: 64, 32>}, {pipeline_mode = #tpu.pipeline_mode<synchronous>, transform_indices = @transform_6, window_bounds = array<i64: 1, 32>}, {transform_indices = @transform_7, window_bounds = array<i64: 8, 32>}]} {
    %c0 = arith.constant 0 : index
    %c0_0 = arith.constant 0 : index
    %0 = vector.load %arg1[%c0, %c0_0] : memref<8x32xf32, #tpu.memory_space<vmem>>, vector<8x32xf32>
    %c0_1 = arith.constant 0 : index
    %c0_2 = arith.constant 0 : index
    %1 = vector.load %arg2[%c0_1, %c0_2] : memref<32x64xf32, #tpu.memory_space<vmem>>, vector<32x64xf32>
    %c0_3 = arith.constant 0 : index
    %c0_4 = arith.constant 0 : index
    %2 = vector.load %arg3[%c0_3, %c0_4] : memref<1x64xf32, #tpu.memory_space<vmem>>, vector<1x64xf32>
    %cst = arith.constant dense<0.000000e+00> : vector<8x64xf32>
    %3 = tpu.matmul %0, %1, %cst {dimension_numbers = #tpu.dot_dimension_numbers<[1], [0], [0], [1], [0, 0, 1, 1], [], []>} : vector<8x32xf32>, vector<32x64xf32>, vector<8x64xf32> -> vector<8x64xf32>
    %4 = vector.broadcast %2 : vector<1x64xf32> to vector<8x64xf32>
    %5 = arith.addf %3, %4 : vector<8x64xf32>
    %cst_5 = arith.constant 5.000000e-01 : f32
    %6 = vector.broadcast %cst_5 : f32 to vector<8x64xf32>
    %7 = arith.mulf %6, %5 : vector<8x64xf32>
    %cst_6 = arith.constant 4.471500e-02 : f32
    %8 = vector.broadcast %cst_6 : f32 to vector<8x64xf32>
    %9 = arith.mulf %8, %5 : vector<8x64xf32>
    %10 = arith.mulf %9, %5 : vector<8x64xf32>
    %11 = arith.mulf %10, %5 : vector<8x64xf32>
    %12 = arith.addf %5, %11 : vector<8x64xf32>
    %cst_7 = arith.constant 0.797884583 : f32
    %13 = vector.broadcast %cst_7 : f32 to vector<8x64xf32>
    %14 = arith.mulf %13, %12 : vector<8x64xf32>
    %15 = math.tanh %14 : vector<8x64xf32>
    %cst_8 = arith.constant 1.000000e+00 : f32
    %16 = vector.broadcast %cst_8 : f32 to vector<8x64xf32>
    %17 = arith.addf %16, %15 : vector<8x64xf32>
    %18 = arith.mulf %7, %17 : vector<8x64xf32>
    %c0_9 = arith.constant 0 : index
    %c0_10 = arith.constant 0 : index
    %19 = vector.load %arg4[%c0_9, %c0_10] : memref<64x64xf32, #tpu.memory_space<vmem>>, vector<64x64xf32>
    %c0_11 = arith.constant 0 : index
    %c0_12 = arith.constant 0 : index
    %20 = vector.load %arg5[%c0_11, %c0_12] : memref<1x64xf32, #tpu.memory_space<vmem>>, vector<1x64xf32>
    %cst_13 = arith.constant dense<0.000000e+00> : vector<8x64xf32>
    %21 = tpu.matmul %18, %19, %cst_13 {dimension_numbers = #tpu.dot_dimension_numbers<[1], [0], [0], [1], [0, 0, 1, 1], [], []>} : vector<8x64xf32>, vector<64x64xf32>, vector<8x64xf32> -> vector<8x64xf32>
    %22 = vector.broadcast %20 : vector<1x64xf32> to vector<8x64xf32>
    %23 = arith.addf %21, %22 : vector<8x64xf32>
    %cst_14 = arith.constant 5.000000e-01 : f32
    %24 = vector.broadcast %cst_14 : f32 to vector<8x64xf32>
    %25 = arith.mulf %24, %23 : vector<8x64xf32>
    %cst_15 = arith.constant 4.471500e-02 : f32
    %26 = vector.broadcast %cst_15 : f32 to vector<8x64xf32>
    %27 = arith.mulf %26, %23 : vector<8x64xf32>
    %28 = arith.mulf %27, %23 : vector<8x64xf32>
    %29 = arith.mulf %28, %23 : vector<8x64xf32>
    %30 = arith.addf %23, %29 : vector<8x64xf32>
    %cst_16 = arith.constant 0.797884583 : f32
    %31 = vector.broadcast %cst_16 : f32 to vector<8x64xf32>
    %32 = arith.mulf %31, %30 : vector<8x64xf32>
    %33 = math.tanh %32 : vector<8x64xf32>
    %cst_17 = arith.constant 1.000000e+00 : f32
    %34 = vector.broadcast %cst_17 : f32 to vector<8x64xf32>
    %35 = arith.addf %34, %33 : vector<8x64xf32>
    %36 = arith.mulf %25, %35 : vector<8x64xf32>
    %c0_18 = arith.constant 0 : index
    %c0_19 = arith.constant 0 : index
    %37 = vector.load %arg6[%c0_18, %c0_19] : memref<64x32xf32, #tpu.memory_space<vmem>>, vector<64x32xf32>
    %c0_20 = arith.constant 0 : index
    %c0_21 = arith.constant 0 : index
    %38 = vector.load %arg7[%c0_20, %c0_21] : memref<1x32xf32, #tpu.memory_space<vmem>>, vector<1x32xf32>
    %cst_22 = arith.constant dense<0.000000e+00> : vector<8x32xf32>
    %39 = tpu.matmul %36, %37, %cst_22 {dimension_numbers = #tpu.dot_dimension_numbers<[1], [0], [0], [1], [0, 0, 1, 1], [], []>} : vector<8x64xf32>, vector<64x32xf32>, vector<8x32xf32> -> vector<8x32xf32>
    %40 = vector.broadcast %38 : vector<1x32xf32> to vector<8x32xf32>
    %41 = arith.addf %39, %40 : vector<8x32xf32>
    %c0_23 = arith.constant 0 : index
    %c0_24 = arith.constant 0 : index
    %42 = vector.load %arg8[%c0_23, %c0_24] : memref<8x32xf32, #tpu.memory_space<vmem>>, vector<8x32xf32>
    tpu.vector_store %arg8[%c0_23, %c0_24], %41 {strides = array<i32>} : memref<8x32xf32, #tpu.memory_space<vmem>>, vector<8x32xf32>,
    return
  }
  func.func @transform_0(%arg0: i32) -> (i32, i32) {
    %c0_i32 = arith.constant 0 : i32
    %c0_i32_0 = arith.constant 0 : i32
    return %arg0, %c0_i32 : i32, i32
  }
  func.func @transform_1(%arg0: i32) -> (i32, i32) {
    %c0_i32 = arith.constant 0 : i32
    %c0_i32_0 = arith.constant 0 : i32
    %c0_i32_1 = arith.constant 0 : i32
    return %c0_i32, %c0_i32_0 : i32, i32
  }
  func.func @transform_2(%arg0: i32) -> (i32, i32) {
    %c0_i32 = arith.constant 0 : i32
    %c0_i32_0 = arith.constant 0 : i32
    %c0_i32_1 = arith.constant 0 : i32
    return %c0_i32, %c0_i32_0 : i32, i32
  }
  func.func @transform_3(%arg0: i32) -> (i32, i32) {
    %c0_i32 = arith.constant 0 : i32
    %c0_i32_0 = arith.constant 0 : i32
    %c0_i32_1 = arith.constant 0 : i32
    return %c0_i32, %c0_i32_0 : i32, i32
  }
  func.func @transform_4(%arg0: i32) -> (i32, i32) {
    %c0_i32 = arith.constant 0 : i32
    %c0_i32_0 = arith.constant 0 : i32
    %c0_i32_1 = arith.constant 0 : i32
    return %c0_i32, %c0_i32_0 : i32, i32
  }
  func.func @transform_5(%arg0: i32) -> (i32, i32) {
    %c0_i32 = arith.constant 0 : i32
    %c0_i32_0 = arith.constant 0 : i32
    %c0_i32_1 = arith.constant 0 : i32
    return %c0_i32, %c0_i32_0 : i32, i32
  }
  func.func @transform_6(%arg0: i32) -> (i32, i32) {
    %c0_i32 = arith.constant 0 : i32
    %c0_i32_0 = arith.constant 0 : i32
    %c0_i32_1 = arith.constant 0 : i32
    return %c0_i32, %c0_i32_0 : i32, i32
  }
  func.func @transform_7(%arg0: i32) -> (i32, i32) {
    %c0_i32 = arith.constant 0 : i32
    %c0_i32_0 = arith.constant 0 : i32
    return %arg0, %c0_i32 : i32, i32
  }
}

</mosaic_0001>

<llo_original>
// kernel: tpu_custom_call.1
$region0: #{tpu_custom_call.1}
  #allocation0 [shape = 'u32[]', space=smem, size = 0x4, offset = 0x4, fixed_abs, tag = 'smem constant byte address 0x4 - core index']
  #allocation1 [shape = 'u32[72,128]{1,0:T(1,128)}', space=vmem, size = 0x9000, scoped, tag = 'internal scratch']
  %s0 = inlined_call_operand.hbm [shape: f32[16,32], index: 0, kind: input, shape index: {}]
  %s1 = inlined_call_operand.vmem [shape: f32[32,64], index: 1, kind: input, shape index: {}]
  %s2 = inlined_call_operand.vmem [shape: f32[1,64], index: 2, kind: input, shape index: {}]
  %s3 = inlined_call_operand.vmem [shape: f32[64,64], index: 3, kind: input, shape index: {}]
  %s4 = inlined_call_operand.vmem [shape: f32[1,64], index: 4, kind: input, shape index: {}]
  %s5 = inlined_call_operand.vmem [shape: f32[64,32], index: 5, kind: input, shape index: {}]
  %s6 = inlined_call_operand.vmem [shape: f32[1,32], index: 6, kind: input, shape index: {}]
  %s7 = inlined_call_operand.hbm [shape: f32[16,32], index: 7, kind: output, shape index: {}]
  %s8 = sld [smem:[#allocation0]]
  $region65: #{tpu_custom_call.1} parent=0
    _
  %s10 = ssub.s32 1, %s8
  %s11 = scalar_select 0, %s10, %s8
  $region1: #{tpu_custom_call.1} parent=0
    #allocation2 [shape = 'u8[8192]{0}', space=vmem, size = 0x2000, scoped, tag = 'input window, operand 0']
    #allocation3 [shape = 's32[2]{0}', space=sflag, size = 0x8, scoped, tag = 'scoped memory for tpu_custom_call.1']
    #allocation4 [shape = 's32[2]{0}', space=sflag, size = 0x8, scoped, tag = 'scoped memory for tpu_custom_call.1']
    #allocation5 [shape = 'u8[8192]{0}', space=vmem, size = 0x2000, scoped, tag = 'output window, operand 0']
    %12 = vsyncpa [#allocation3], 0
    %s13 = scalar_lea.sflag [#allocation3], 1
    %14 = vsyncpa %s13, 0
    %15 = vsyncpa [#allocation4], 0
    %s16 = scalar_lea.sflag [#allocation4], 1
    %17 = vsyncpa %s16, 0
    loop: start=0, step=1, limit=4
    $region2: #{tpu_custom_call.1} parent=1 // loop_pre_header
      _
    $region3: #{tpu_custom_call.1} parent=1 // loop_header
      %s19 = sphi 0, %s23
      %p20 = scmp.ge.s32.totalorder %s19, 4
      %s29 = sphi 0, %s31
      %s32 = sphi 0, %s29
      %s33 = sphi 0, %s32
      %s49 = sphi 0, %s33
      %s53 = sphi 0, %s53
      %s55 = sphi 0, %s53
      %s56 = sphi 0, %s55
      %s70 = sphi 0, %s56
      %s74 = sphi 0, %s74
      %s76 = sphi 0, %s74
      %s77 = sphi 0, %s76
      %s91 = sphi 0, %s77
      %s95 = sphi 0, %s95
      %s97 = sphi 0, %s95
      %s98 = sphi 0, %s97
      %s112 = sphi 0, %s98
      %s116 = sphi 0, %s116
      %s118 = sphi 0, %s116
      %s119 = sphi 0, %s118
      %s133 = sphi 0, %s119
      %s137 = sphi 0, %s137
      %s139 = sphi 0, %s137
      %s140 = sphi 0, %s139
      %s154 = sphi 0, %s140
      %s158 = sphi 0, %s158
      %s160 = sphi 0, %s158
      %s161 = sphi 0, %s160
      %s175 = sphi 0, %s161
      %s181 = sphi 0, %s183
      %s184 = sphi 0, %s181
      %s185 = sphi 0, %s184
      %s201 = sphi 0, %s185
    $region4: #{tpu_custom_call.1} parent=1 // loop_header_branch
      %22 = sbr.rel (%p20) target = $region8
    $region5: #{tpu_custom_call.1} parent=1 // loop_body
      %s24 = ssub.s32 %s19, 1
      %s25 = ssub.s32 %s19, 2
      %s26 = sadd.s32 %s19, 1
      %s27 = ssub.s32 %s19, %s26
      %p28 = scmp.eq.s32.totalorder %s27, 0
      %s30 = sadd.s32 %s29, 1
      %s31 = scalar_select %p28, %s29, %s30
      %p34 = pneg %p28
      %p35 = scmp.eq.s32.totalorder %s19, 1
      %p36 = por %p34, %p35
      %p37 = scmp.ne.s32.totalorder %s29, %s32
      %p38 = scmp.eq.s32.totalorder %s19, 0
      %p39 = por %p37, %p38
      %p40 = scmp.ne.s32.totalorder %s29, %s32
      %p41 = scmp.eq.s32.totalorder %s24, 1
      %p42 = por %p40, %p41
      %p43 = scmp.ne.s32.totalorder %s32, %s33
      %p44 = scmp.eq.s32.totalorder %s24, 0
      %p45 = por %p43, %p44
      %p46 = scmp.ne.s32.totalorder %s32, %s33
      %p47 = scmp.eq.s32.totalorder %s25, 1
      %p48 = por %p46, %p47
      %p50 = scmp.ne.s32.totalorder %s33, %s49
      %p51 = scmp.eq.s32.totalorder %s25, 0
      %p52 = por %p50, %p51
      %s54 = sadd.s32 %s53, 1
      %p57 = scmp.eq.s32.totalorder %s19, 1
      %p58 = scmp.ne.s32.totalorder %s53, %s55
      %p59 = scmp.eq.s32.totalorder %s19, 0
      %p60 = por %p58, %p59
      %p61 = scmp.ne.s32.totalorder %s53, %s55
      %p62 = scmp.eq.s32.totalorder %s24, 1
      %p63 = por %p61, %p62
      %p64 = scmp.ne.s32.totalorder %s55, %s56
      %p65 = scmp.eq.s32.totalorder %s24, 0
      %p66 = por %p64, %p65
      %p67 = scmp.ne.s32.totalorder %s55, %s56
      %p68 = scmp.eq.s32.totalorder %s25, 1
      %p69 = por %p67, %p68
      %p71 = scmp.ne.s32.totalorder %s56, %s70
      %p72 = scmp.eq.s32.totalorder %s25, 0
      %p73 = por %p71, %p72
      %s75 = sadd.s32 %s74, 1
      %p78 = scmp.eq.s32.totalorder %s19, 1
      %p79 = scmp.ne.s32.totalorder %s74, %s76
      %p80 = scmp.eq.s32.totalorder %s19, 0
      %p81 = por %p79, %p80
      %p82 = scmp.ne.s32.totalorder %s74, %s76
      %p83 = scmp.eq.s32.totalorder %s24, 1
      %p84 = por %p82, %p83
      %p85 = scmp.ne.s32.totalorder %s76, %s77
      %p86 = scmp.eq.s32.totalorder %s24, 0
      %p87 = por %p85, %p86
      %p88 = scmp.ne.s32.totalorder %s76, %s77
      %p89 = scmp.eq.s32.totalorder %s25, 1
      %p90 = por %p88, %p89
      %p92 = scmp.ne.s32.totalorder %s77, %s91
      %p93 = scmp.eq.s32.totalorder %s25, 0
      %p94 = por %p92, %p93
      %s96 = sadd.s32 %s95, 1
      %p99 = scmp.eq.s32.totalorder %s19, 1
      %p100 = scmp.ne.s32.totalorder %s95, %s97
      %p101 = scmp.eq.s32.totalorder %s19, 0
      %p102 = por %p100, %p101
      %p103 = scmp.ne.s32.totalorder %s95, %s97
      %p104 = scmp.eq.s32.totalorder %s24, 1
      %p105 = por %p103, %p104
      %p106 = scmp.ne.s32.totalorder %s97, %s98
      %p107 = scmp.eq.s32.totalorder %s24, 0
      %p108 = por %p106, %p107
      %p109 = scmp.ne.s32.totalorder %s97, %s98
      %p110 = scmp.eq.s32.totalorder %s25, 1
      %p111 = por %p109, %p110
      %p113 = scmp.ne.s32.totalorder %s98, %s112
      %p114 = scmp.eq.s32.totalorder %s25, 0
      %p115 = por %p113, %p114
      %s117 = sadd.s32 %s116, 1
      %p120 = scmp.eq.s32.totalorder %s19, 1
      %p121 = scmp.ne.s32.totalorder %s116, %s118
      %p122 = scmp.eq.s32.totalorder %s19, 0
      %p123 = por %p121, %p122
      %p124 = scmp.ne.s32.totalorder %s116, %s118
      %p125 = scmp.eq.s32.totalorder %s24, 1
      %p126 = por %p124, %p125
      %p127 = scmp.ne.s32.totalorder %s118, %s119
      %p128 = scmp.eq.s32.totalorder %s24, 0
      %p129 = por %p127, %p128
      %p130 = scmp.ne.s32.totalorder %s118, %s119
      %p131 = scmp.eq.s32.totalorder %s25, 1
      %p132 = por %p130, %p131
      %p134 = scmp.ne.s32.totalorder %s119, %s133
      %p135 = scmp.eq.s32.totalorder %s25, 0
      %p136 = por %p134, %p135
      %s138 = sadd.s32 %s137, 1
      %p141 = scmp.eq.s32.totalorder %s19, 1
      %p142 = scmp.ne.s32.totalorder %s137, %s139
      %p143 = scmp.eq.s32.totalorder %s19, 0
      %p144 = por %p142, %p143
      %p145 = scmp.ne.s32.totalorder %s137, %s139
      %p146 = scmp.eq.s32.totalorder %s24, 1
      %p147 = por %p145, %p146
      %p148 = scmp.ne.s32.totalorder %s139, %s140
      %p149 = scmp.eq.s32.totalorder %s24, 0
      %p150 = por %p148, %p149
      %p151 = scmp.ne.s32.totalorder %s139, %s140
      %p152 = scmp.eq.s32.totalorder %s25, 1
      %p153 = por %p151, %p152
      %p155 = scmp.ne.s32.totalorder %s140, %s154
      %p156 = scmp.eq.s32.totalorder %s25, 0
      %p157 = por %p155, %p156
      %s159 = sadd.s32 %s158, 1
      %p162 = scmp.eq.s32.totalorder %s19, 1
      %p163 = scmp.ne.s32.totalorder %s158, %s160
      %p164 = scmp.eq.s32.totalorder %s19, 0
      %p165 = por %p163, %p164
      %p166 = scmp.ne.s32.totalorder %s158, %s160
      %p167 = scmp.eq.s32.totalorder %s24, 1
      %p168 = por %p166, %p167
      %p169 = scmp.ne.s32.totalorder %s160, %s161
      %p170 = scmp.eq.s32.totalorder %s24, 0
      %p171 = por %p169, %p170
      %p172 = scmp.ne.s32.totalorder %s160, %s161
      %p173 = scmp.eq.s32.totalorder %s25, 1
      %p174 = por %p172, %p173
      %p176 = scmp.ne.s32.totalorder %s161, %s175
      %p177 = scmp.eq.s32.totalorder %s25, 0
      %p178 = por %p176, %p177
      %s179 = ssub.s32 %s19, %s26
      %p180 = scmp.eq.s32.totalorder %s179, 0
      %s182 = sadd.s32 %s181, 1
      %s183 = scalar_select %p180, %s181, %s182
      %p186 = pneg %p180
      %p187 = scmp.eq.s32.totalorder %s19, 1
      %p188 = por %p186, %p187
      %p189 = scmp.ne.s32.totalorder %s181, %s184
      %p190 = scmp.eq.s32.totalorder %s19, 0
      %p191 = por %p189, %p190
      %p192 = scmp.ne.s32.totalorder %s181, %s184
      %p193 = scmp.eq.s32.totalorder %s24, 1
      %p194 = por %p192, %p193
      %p195 = scmp.ne.s32.totalorder %s184, %s185
      %p196 = scmp.eq.s32.totalorder %s24, 0
      %p197 = por %p195, %p196
      %p198 = scmp.ne.s32.totalorder %s184, %s185
      %p199 = scmp.eq.s32.totalorder %s25, 1
      %p200 = por %p198, %p199
      %p202 = scmp.ne.s32.totalorder %s185, %s201
      %p203 = scmp.eq.s32.totalorder %s25, 0
      %p204 = por %p202, %p203
      %p205 = scmp.le.s32.totalorder 1, %s19
      %p206 = scmp.lt.s32.totalorder %s19, 3
      %p207 = pnand %p205, %p206
      %p208 = pneg %p207
      // Predicated region
      $region9: #{tpu_custom_call.1} parent=5 // pred_check
        _
      $region10: #{tpu_custom_call.1} parent=5 // pred_check_branch
        %210 = sbr.rel (%p207) target = $region12
      $region11: #{tpu_custom_call.1} parent=5 // pred_region
        %s211 = ssub.s32 %s19, 1
        // Predicated region
        $region13: #{tpu_custom_call.1} parent=11 // pred_check
          %p212 = pneg %p66
        $region14: #{tpu_custom_call.1} parent=11 // pred_check_branch
          %214 = sbr.rel (%p212) target = $region16
        $region15: #{tpu_custom_call.1} parent=11 // pred_region
          _
        $region16: #{tpu_custom_call.1} parent=11 // pred_fallthru
          _
        // Predicated region
        $region17: #{tpu_custom_call.1} parent=11 // pred_check
          %p215 = pneg %p87
        $region18: #{tpu_custom_call.1} parent=11 // pred_check_branch
          %217 = sbr.rel (%p215) target = $region20
        $region19: #{tpu_custom_call.1} parent=11 // pred_region
          _
        $region20: #{tpu_custom_call.1} parent=11 // pred_fallthru
          _
        // Predicated region
        $region21: #{tpu_custom_call.1} parent=11 // pred_check
          %p218 = pneg %p108
        $region22: #{tpu_custom_call.1} parent=11 // pred_check_branch
          %220 = sbr.rel (%p218) target = $region24
        $region23: #{tpu_custom_call.1} parent=11 // pred_region
          _
        $region24: #{tpu_custom_call.1} parent=11 // pred_fallthru
          _
        // Predicated region
        $region25: #{tpu_custom_call.1} parent=11 // pred_check
          %p221 = pneg %p129
        $region26: #{tpu_custom_call.1} parent=11 // pred_check_branch
          %223 = sbr.rel (%p221) target = $region28
        $region27: #{tpu_custom_call.1} parent=11 // pred_region
          _
        $region28: #{tpu_custom_call.1} parent=11 // pred_fallthru
          _
        // Predicated region
        $region29: #{tpu_custom_call.1} parent=11 // pred_check
          %p224 = pneg %p150
        $region30: #{tpu_custom_call.1} parent=11 // pred_check_branch
          %226 = sbr.rel (%p224) target = $region32
        $region31: #{tpu_custom_call.1} parent=11 // pred_region
          _
        $region32: #{tpu_custom_call.1} parent=11 // pred_fallthru
          _
        // Predicated region
        $region33: #{tpu_custom_call.1} parent=11 // pred_check
          %p227 = pneg %p171
        $region34: #{tpu_custom_call.1} parent=11 // pred_check_branch
          %229 = sbr.rel (%p227) target = $region36
        $region35: #{tpu_custom_call.1} parent=11 // pred_region
          _
        $region36: #{tpu_custom_call.1} parent=11 // pred_fallthru
          _
      $region12: #{tpu_custom_call.1} parent=5 // pred_fallthru
        _
      %p230 = scmp.lt.s32.totalorder %s19, 2
      // Predicated region
      $region37: #{tpu_custom_call.1} parent=5 // pred_check
        %p231 = pneg %p230
      $region38: #{tpu_custom_call.1} parent=5 // pred_check_branch
        %233 = sbr.rel (%p231) target = $region40
      $region39: #{tpu_custom_call.1} parent=5 // pred_region
        // Predicated region
        $region41: #{tpu_custom_call.1} parent=39 // pred_check
          %p234 = pneg %p39
        $region42: #{tpu_custom_call.1} parent=39 // pred_check_branch
          %236 = sbr.rel (%p234) target = $region44
        $region43: #{tpu_custom_call.1} parent=39 // pred_region
          %s237 = sand.u32 %s29, 1
          %s238 = scalar_lea.sflag [#allocation3], %s237
          %s239 = sand.u32 %s29, 1
          %s240 = smul.addr %s239, 8
          %s241 = scalar_lea.vmem [#allocation2], %s240
          %243 = vsyncadd %s238, 0
          %s244 = smul.addr %s19, 8
          %s245 = scalar_lea.hbm %s0, %s244
          %s247 = sshll.u32 %s245, 4
          %s248 = int_to_ptr.hbm [resolvable:$true] %s247
          %s249 = sshll.u32 %s241, 4
          %s250 = int_to_ptr.vmem [resolvable:$true] %s249
          %252 = dma.hbm_to_vmem [thread:$0]  %s248, 128, %s250, %s238
        $region44: #{tpu_custom_call.1} parent=39 // pred_fallthru
          _
      $region40: #{tpu_custom_call.1} parent=5 // pred_fallthru
        _
      %p253 = scmp.le.s32.totalorder 1, %s19
      %p254 = scmp.lt.s32.totalorder %s19, 3
      %p255 = pnand %p253, %p254
      %p256 = pneg %p255
      // Predicated region
      $region45: #{tpu_custom_call.1} parent=5 // pred_check
        _
      $region46: #{tpu_custom_call.1} parent=5 // pred_check_branch
        %258 = sbr.rel (%p255) target = $region48
      $region47: #{tpu_custom_call.1} parent=5 // pred_region
        %s259 = ssub.s32 %s19, 1
        %s260 = sand.u32 %s32, 1
        %s261 = scalar_lea.sflag [#allocation3], %s260
        %s262 = sand.u32 %s32, 1
        %s263 = smul.addr %s262, 8
        %s264 = scalar_lea.vmem [#allocation2], %s263
        // Predicated region
        $region49: #{tpu_custom_call.1} parent=47 // pred_check
          %p265 = pneg %p45
        $region50: #{tpu_custom_call.1} parent=47 // pred_check_branch
          %267 = sbr.rel (%p265) target = $region52
        $region51: #{tpu_custom_call.1} parent=47 // pred_region
          %269 = dma.done %s261, 128
        $region52: #{tpu_custom_call.1} parent=47 // pred_fallthru
          _
        %s270 = sand.u32 %s32, 1
        %s271 = scalar_lea.sflag [#allocation3], %s270
        %s272 = sand.u32 %s32, 1
        %s273 = smul.addr %s272, 8
        %s274 = scalar_lea.vmem [#allocation2], %s273
        %p275 = pneg %p45
        %p276 = pneg %p42
        %p277 = pneg %p66
        %p278 = pneg %p63
        %p279 = pneg %p87
        %p280 = pneg %p84
        %p281 = pneg %p108
        %p282 = pneg %p105
        %p283 = pneg %p129
        %p284 = pneg %p126
        %p285 = pneg %p150
        %p286 = pneg %p147
        %p287 = pneg %p171
        %p288 = pneg %p168
        %p289 = pneg %p197
        %p290 = pneg %p194
        %s291 = sand.u32 %s184, 1
        %s292 = scalar_lea.sflag [#allocation4], %s291
        %s293 = sand.u32 %s184, 1
        %s294 = smul.addr %s293, 8
        %s295 = scalar_lea.vmem [#allocation5], %s294
        %v296 = vld [vmem:[%s264] sm:$0xff]
        %v297 = vld [vmem:[%s1] sm:$0xff]
        %v298 = vld [vmem:[%s1 + $0x8] sm:$0xff]
        %v299 = vld [vmem:[%s1 + $0x10] sm:$0xff]
        %v300 = vld [vmem:[%s1 + $0x18] sm:$0xff]
        %v301 = vld [vmem:[%s2] sm:$0x1]
        %v303 = vperm.slane %v301, 0
        %vm305 = vcmask 261120
        %v307 = vsel %vm305, %v296, 0
        %309 = vmatpush.msra.mxu0 0.0
        %310 = vmatpush.msra.mxu0 0.0
        %311 = vmatpush.msra.mxu0 0.0
        %312 = vmatpush.msra.mxu0 0.0
        %313 = vmatpush.msra.mxu0 0.0
        %314 = vmatpush.msra.mxu0 0.0
        %315 = vmatpush.msra.mxu0 0.0
        %316 = vmatpush.msra.mxu0 0.0
        %317 = vmatpush.msra.mxu0 0.0
        %318 = vmatpush.msra.mxu0 0.0
        %319 = vmatpush.msra.mxu0 0.0
        %320 = vmatpush.msra.mxu0 0.0
        %321 = vmatpush.msra.mxu0 %v300
        %322 = vmatpush.msra.mxu0 %v299
        %323 = vmatpush.msra.mxu0 %v298
        %324 = vmatpush.msra.mxu0 %v297
        %325 = vmatmul.f32.gmra.mxu0 %v307
        %v326 = vpop.f32.mrf.mxu0
        %v327 = vadd.f32 %v303, %v326
        %328 = vdwg.mxu0
        %v329 = vmul.f32 %v327, 0.5
        %v330 = vmul.f32 %v327, 0.044715
        %v331 = vmul.f32 %v330, %v327
        %v332 = vmul.f32 %v331, %v327
        %v333 = vadd.f32 %v327, %v332
        %v334 = vmul.f32 %v333, 0.7978846
        %v335 = vtanh.pop %v334
        %v336 = vadd.f32 %v335, 1.0
        %v337 = vmul.f32 %v329, %v336
        %v338 = vld [vmem:[%s3] sm:$0xff]
        %v339 = vld [vmem:[%s3 + $0x8] sm:$0xff]
        %v340 = vld [vmem:[%s3 + $0x10] sm:$0xff]
        %v341 = vld [vmem:[%s3 + $0x18] sm:$0xff]
        %v342 = vld [vmem:[%s3 + $0x20] sm:$0xff]
        %v343 = vld [vmem:[%s3 + $0x28] sm:$0xff]
        %v344 = vld [vmem:[%s3 + $0x30] sm:$0xff]
        %v345 = vld [vmem:[%s3 + $0x38] sm:$0xff]
        %v346 = vld [vmem:[%s4] sm:$0x1]
        %v348 = vperm.slane %v346, 0
        %vm350 = vcmask 523264
        %v352 = vsel %vm350, %v337, 0
        %354 = vmatpush.msra.mxu0 0.0
        %355 = vmatpush.msra.mxu0 0.0
        %356 = vmatpush.msra.mxu0 0.0
        %357 = vmatpush.msra.mxu0 0.0
        %358 = vmatpush.msra.mxu0 0.0
        %359 = vmatpush.msra.mxu0 0.0
        %360 = vmatpush.msra.mxu0 0.0
        %361 = vmatpush.msra.mxu0 0.0
        %362 = vmatpush.msra.mxu0 %v345
        %363 = vmatpush.msra.mxu0 %v344
        %364 = vmatpush.msra.mxu0 %v343
        %365 = vmatpush.msra.mxu0 %v342
        %366 = vmatpush.msra.mxu0 %v341
        %367 = vmatpush.msra.mxu0 %v340
        %368 = vmatpush.msra.mxu0 %v339
        %369 = vmatpush.msra.mxu0 %v338
        %370 = vmatmul.f32.gmra.mxu0 %v352
        %v371 = vpop.f32.mrf.mxu0
        %v372 = vadd.f32 %v348, %v371
        %373 = vdwg.mxu0
        %v374 = vmul.f32 %v372, 0.5
        %v375 = vmul.f32 %v372, 0.044715
        %v376 = vmul.f32 %v375, %v372
        %v377 = vmul.f32 %v376, %v372
        %v378 = vadd.f32 %v372, %v377
        %v379 = vmul.f32 %v378, 0.7978846
        %v380 = vtanh.pop %v379
        %v381 = vadd.f32 %v380, 1.0
        %v382 = vmul.f32 %v374, %v381
        %v383 = vld [vmem:[%s5] sm:$0xff]
        %v384 = vld [vmem:[%s5 + $0x8] sm:$0xff]
        %v385 = vld [vmem:[%s5 + $0x10] sm:$0xff]
        %v386 = vld [vmem:[%s5 + $0x18] sm:$0xff]
        %v387 = vld [vmem:[%s5 + $0x20] sm:$0xff]
        %v388 = vld [vmem:[%s5 + $0x28] sm:$0xff]
        %v389 = vld [vmem:[%s5 + $0x30] sm:$0xff]
        %v390 = vld [vmem:[%s5 + $0x38] sm:$0xff]
        %v391 = vld [vmem:[%s6] sm:$0x1]
        %v393 = vperm.slane %v391, 0
        %v396 = vsel %vm350, %v382, 0
        %398 = vmatpush.msra.mxu0 0.0
        %399 = vmatpush.msra.mxu0 0.0
        %400 = vmatpush.msra.mxu0 0.0
        %401 = vmatpush.msra.mxu0 0.0
        %402 = vmatpush.msra.mxu0 0.0
        %403 = vmatpush.msra.mxu0 0.0
        %404 = vmatpush.msra.mxu0 0.0
        %405 = vmatpush.msra.mxu0 0.0
        %406 = vmatpush.msra.mxu0 %v390
        %407 = vmatpush.msra.mxu0 %v389
        %408 = vmatpush.msra.mxu0 %v388
        %409 = vmatpush.msra.mxu0 %v387
        %410 = vmatpush.msra.mxu0 %v386
        %411 = vmatpush.msra.mxu0 %v385
        %412 = vmatpush.msra.mxu0 %v384
        %413 = vmatpush.msra.mxu0 %v383
        %414 = vmatmul.f32.gmra.mxu0 %v396
        %v415 = vpop.f32.mrf.mxu0
        %v416 = vadd.f32 %v393, %v415
        %417 = vdwg.mxu0
        %418 = vst.msk [vmem:[%s295] sm:$0xff] %vm305, %v416
        %s419 = sand.u32 %s184, 1
        %s420 = scalar_lea.sflag [#allocation4], %s419
        %s421 = sand.u32 %s184, 1
        %s422 = smul.addr %s421, 8
        %s423 = scalar_lea.vmem [#allocation5], %s422
        // Predicated region
        $region53: #{tpu_custom_call.1} parent=47 // pred_check
          %p424 = pneg %p194
        $region54: #{tpu_custom_call.1} parent=47 // pred_check_branch
          %426 = sbr.rel (%p424) target = $region56
        $region55: #{tpu_custom_call.1} parent=47 // pred_region
          %428 = vsyncadd %s420, 0
          %s429 = smul.addr %s24, 8
          %s430 = scalar_lea.hbm %s7, %s429
          %s432 = sshll.u32 %s423, 4
          %s433 = int_to_ptr.vmem [resolvable:$true] %s432
          %s434 = sshll.u32 %s430, 4
          %s435 = int_to_ptr.hbm [resolvable:$true] %s434
          %437 = dma.vmem_to_hbm [thread:$0]  %s433, 128, %s435, %s420
        $region56: #{tpu_custom_call.1} parent=47 // pred_fallthru
          _
      $region48: #{tpu_custom_call.1} parent=5 // pred_fallthru
        _
      %p438 = scmp.le.s32.totalorder 2, %s19
      // Predicated region
      $region57: #{tpu_custom_call.1} parent=5 // pred_check
        %p439 = pneg %p438
      $region58: #{tpu_custom_call.1} parent=5 // pred_check_branch
        %441 = sbr.rel (%p439) target = $region60
      $region59: #{tpu_custom_call.1} parent=5 // pred_region
        %s442 = ssub.s32 %s19, 2
        // Predicated region
        $region61: #{tpu_custom_call.1} parent=59 // pred_check
          %p443 = pneg %p200
        $region62: #{tpu_custom_call.1} parent=59 // pred_check_branch
          %445 = sbr.rel (%p443) target = $region64
        $region63: #{tpu_custom_call.1} parent=59 // pred_region
          %s446 = sand.u32 %s185, 1
          %s447 = scalar_lea.sflag [#allocation4], %s446
          %s448 = sand.u32 %s185, 1
          %s449 = smul.addr %s448, 8
          %s450 = scalar_lea.vmem [#allocation5], %s449
          %452 = dma.done %s447, 128
        $region64: #{tpu_custom_call.1} parent=59 // pred_fallthru
          _
      $region60: #{tpu_custom_call.1} parent=5 // pred_fallthru
        _
    $region6: #{tpu_custom_call.1} parent=1 // loop_footer
      %s23 = sadd.s32 1, %s19
    $region7: #{tpu_custom_call.1} parent=1 // loop_footer_branch
      %18 = sbr.rel target = $region3
    $region8: #{tpu_custom_call.1} parent=1 // loop_exit
      _
    %453 = vsyncpa [#allocation3], 1
    %s454 = scalar_lea.sflag [#allocation3], 1
    %455 = vsyncpa %s454, 1
    %456 = vsyncpa [#allocation4], 1
    %s457 = scalar_lea.sflag [#allocation4], 1
    %458 = vsyncpa %s457, 1

// kernel: tpu_custom_call.1
$region0: #{tpu_custom_call.1}
  #allocation0 [shape = 'u32[]', space=smem, size = 0x4, offset = 0x4, fixed_abs, tag = 'smem constant byte address 0x4 - core index']
  #allocation1 [shape = 'u32[72,128]{1,0:T(1,128)}', space=vmem, size = 0x9000, scoped, tag = 'internal scratch']
  %s0 = inlined_call_operand.hbm [shape: f32[16,32], index: 0, kind: input, shape index: {}]
  %s1 = inlined_call_operand.vmem [shape: f32[32,64], index: 1, kind: input, shape index: {}]
  %s2 = inlined_call_operand.vmem [shape: f32[1,64], index: 2, kind: input, shape index: {}]
  %s3 = inlined_call_operand.vmem [shape: f32[64,64], index: 3, kind: input, shape index: {}]
  %s4 = inlined_call_operand.vmem [shape: f32[1,64], index: 4, kind: input, shape index: {}]
  %s5 = inlined_call_operand.vmem [shape: f32[64,32], index: 5, kind: input, shape index: {}]
  %s6 = inlined_call_operand.vmem [shape: f32[1,32], index: 6, kind: input, shape index: {}]
  %s7 = inlined_call_operand.hbm [shape: f32[16,32], index: 7, kind: output, shape index: {}]
  %s8 = sld [smem:[#allocation0]]
  $region65: #{tpu_custom_call.1} parent=0
    _
  %s10 = ssub.s32 1, %s8
  %s11 = scalar_select 0, %s10, %s8
  $region1: #{tpu_custom_call.1} parent=0
    #allocation2 [shape = 'u8[8192]{0}', space=vmem, size = 0x2000, scoped, tag = 'input window, operand 0']
    #allocation3 [shape = 's32[2]{0}', space=sflag, size = 0x8, scoped, tag = 'scoped memory for tpu_custom_call.1']
    #allocation4 [shape = 's32[2]{0}', space=sflag, size = 0x8, scoped, tag = 'scoped memory for tpu_custom_call.1']
    #allocation5 [shape = 'u8[8192]{0}', space=vmem, size = 0x2000, scoped, tag = 'output window, operand 0']
    %12 = vsyncpa [#allocation3], 0
    %s13 = scalar_lea.sflag [#allocation3], 1
    %14 = vsyncpa %s13, 0
    %15 = vsyncpa [#allocation4], 0
    %s16 = scalar_lea.sflag [#allocation4], 1
    %17 = vsyncpa %s16, 0
    loop: start=0, step=1, limit=4
    $region2: #{tpu_custom_call.1} parent=1 // loop_pre_header
      _
    $region3: #{tpu_custom_call.1} parent=1 // loop_header
      %s19 = sphi 0, %s23
      %p20 = scmp.ge.s32.totalorder %s19, 4
      %s29 = sphi 0, %s31
      %s32 = sphi 0, %s29
      %s33 = sphi 0, %s32
      %s49 = sphi 0, %s33
      %s53 = sphi 0, %s53
      %s55 = sphi 0, %s53
      %s56 = sphi 0, %s55
      %s70 = sphi 0, %s56
      %s74 = sphi 0, %s74
      %s76 = sphi 0, %s74
      %s77 = sphi 0, %s76
      %s91 = sphi 0, %s77
      %s95 = sphi 0, %s95
      %s97 = sphi 0, %s95
      %s98 = sphi 0, %s97
      %s112 = sphi 0, %s98
      %s116 = sphi 0, %s116
      %s118 = sphi 0, %s116
      %s119 = sphi 0, %s118
      %s133 = sphi 0, %s119
      %s137 = sphi 0, %s137
      %s139 = sphi 0, %s137
      %s140 = sphi 0, %s139
      %s154 = sphi 0, %s140
      %s158 = sphi 0, %s158
      %s160 = sphi 0, %s158
      %s161 = sphi 0, %s160
      %s175 = sphi 0, %s161
      %s181 = sphi 0, %s183
      %s184 = sphi 0, %s181
      %s185 = sphi 0, %s184
      %s201 = sphi 0, %s185
    $region4: #{tpu_custom_call.1} parent=1 // loop_header_branch
      %22 = sbr.rel (%p20) target = $region8
    $region5: #{tpu_custom_call.1} parent=1 // loop_body
      %s24 = ssub.s32 %s19, 1
      %s25 = ssub.s32 %s19, 2
      %s26 = sadd.s32 %s19, 1
      %s27 = ssub.s32 %s19, %s26
      %p28 = scmp.eq.s32.totalorder %s27, 0
      %s30 = sadd.s32 %s29, 1
      %s31 = scalar_select %p28, %s29, %s30
      %p34 = pneg %p28
      %p35 = scmp.eq.s32.totalorder %s19, 1
      %p36 = por %p34, %p35
      %p37 = scmp.ne.s32.totalorder %s29, %s32
      %p38 = scmp.eq.s32.totalorder %s19, 0
      %p39 = por %p37, %p38
      %p40 = scmp.ne.s32.totalorder %s29, %s32
      %p41 = scmp.eq.s32.totalorder %s24, 1
      %p42 = por %p40, %p41
      %p43 = scmp.ne.s32.totalorder %s32, %s33
      %p44 = scmp.eq.s32.totalorder %s24, 0
      %p45 = por %p43, %p44
      %p46 = scmp.ne.s32.totalorder %s32, %s33
      %p47 = scmp.eq.s32.totalorder %s25, 1
      %p48 = por %p46, %p47
      %p50 = scmp.ne.s32.totalorder %s33, %s49
      %p51 = scmp.eq.s32.totalorder %s25, 0
      %p52 = por %p50, %p51
      %s54 = sadd.s32 %s53, 1
      %p57 = scmp.eq.s32.totalorder %s19, 1
      %p58 = scmp.ne.s32.totalorder %s53, %s55
      %p59 = scmp.eq.s32.totalorder %s19, 0
      %p60 = por %p58, %p59
      %p61 = scmp.ne.s32.totalorder %s53, %s55
      %p62 = scmp.eq.s32.totalorder %s24, 1
      %p63 = por %p61, %p62
      %p64 = scmp.ne.s32.totalorder %s55, %s56
      %p65 = scmp.eq.s32.totalorder %s24, 0
      %p66 = por %p64, %p65
      %p67 = scmp.ne.s32.totalorder %s55, %s56
      %p68 = scmp.eq.s32.totalorder %s25, 1
      %p69 = por %p67, %p68
      %p71 = scmp.ne.s32.totalorder %s56, %s70
      %p72 = scmp.eq.s32.totalorder %s25, 0
      %p73 = por %p71, %p72
      %s75 = sadd.s32 %s74, 1
      %p78 = scmp.eq.s32.totalorder %s19, 1
      %p79 = scmp.ne.s32.totalorder %s74, %s76
      %p80 = scmp.eq.s32.totalorder %s19, 0
      %p81 = por %p79, %p80
      %p82 = scmp.ne.s32.totalorder %s74, %s76
      %p83 = scmp.eq.s32.totalorder %s24, 1
      %p84 = por %p82, %p83
      %p85 = scmp.ne.s32.totalorder %s76, %s77
      %p86 = scmp.eq.s32.totalorder %s24, 0
      %p87 = por %p85, %p86
      %p88 = scmp.ne.s32.totalorder %s76, %s77
      %p89 = scmp.eq.s32.totalorder %s25, 1
      %p90 = por %p88, %p89
      %p92 = scmp.ne.s32.totalorder %s77, %s91
      %p93 = scmp.eq.s32.totalorder %s25, 0
      %p94 = por %p92, %p93
      %s96 = sadd.s32 %s95, 1
      %p99 = scmp.eq.s32.totalorder %s19, 1
      %p100 = scmp.ne.s32.totalorder %s95, %s97
      %p101 = scmp.eq.s32.totalorder %s19, 0
      %p102 = por %p100, %p101
      %p103 = scmp.ne.s32.totalorder %s95, %s97
      %p104 = scmp.eq.s32.totalorder %s24, 1
      %p105 = por %p103, %p104
      %p106 = scmp.ne.s32.totalorder %s97, %s98
      %p107 = scmp.eq.s32.totalorder %s24, 0
      %p108 = por %p106, %p107
      %p109 = scmp.ne.s32.totalorder %s97, %s98
      %p110 = scmp.eq.s32.totalorder %s25, 1
      %p111 = por %p109, %p110
      %p113 = scmp.ne.s32.totalorder %s98, %s112
      %p114 = scmp.eq.s32.totalorder %s25, 0
      %p115 = por %p113, %p114
      %s117 = sadd.s32 %s116, 1
      %p120 = scmp.eq.s32.totalorder %s19, 1
      %p121 = scmp.ne.s32.totalorder %s116, %s118
      %p122 = scmp.eq.s32.totalorder %s19, 0
      %p123 = por %p121, %p122
      %p124 = scmp.ne.s32.totalorder %s116, %s118
      %p125 = scmp.eq.s32.totalorder %s24, 1
      %p126 = por %p124, %p125
      %p127 = scmp.ne.s32.totalorder %s118, %s119
      %p128 = scmp.eq.s32.totalorder %s24, 0
      %p129 = por %p127, %p128
      %p130 = scmp.ne.s32.totalorder %s118, %s119
      %p131 = scmp.eq.s32.totalorder %s25, 1
      %p132 = por %p130, %p131
      %p134 = scmp.ne.s32.totalorder %s119, %s133
      %p135 = scmp.eq.s32.totalorder %s25, 0
      %p136 = por %p134, %p135
      %s138 = sadd.s32 %s137, 1
      %p141 = scmp.eq.s32.totalorder %s19, 1
      %p142 = scmp.ne.s32.totalorder %s137, %s139
      %p143 = scmp.eq.s32.totalorder %s19, 0
      %p144 = por %p142, %p143
      %p145 = scmp.ne.s32.totalorder %s137, %s139
      %p146 = scmp.eq.s32.totalorder %s24, 1
      %p147 = por %p145, %p146
      %p148 = scmp.ne.s32.totalorder %s139, %s140
      %p149 = scmp.eq.s32.totalorder %s24, 0
      %p150 = por %p148, %p149
      %p151 = scmp.ne.s32.totalorder %s139, %s140
      %p152 = scmp.eq.s32.totalorder %s25, 1
      %p153 = por %p151, %p152
      %p155 = scmp.ne.s32.totalorder %s140, %s154
      %p156 = scmp.eq.s32.totalorder %s25, 0
      %p157 = por %p155, %p156
      %s159 = sadd.s32 %s158, 1
      %p162 = scmp.eq.s32.totalorder %s19, 1
      %p163 = scmp.ne.s32.totalorder %s158, %s160
      %p164 = scmp.eq.s32.totalorder %s19, 0
      %p165 = por %p163, %p164
      %p166 = scmp.ne.s32.totalorder %s158, %s160
      %p167 = scmp.eq.s32.totalorder %s24, 1
      %p168 = por %p166, %p167
      %p169 = scmp.ne.s32.totalorder %s160, %s161
      %p170 = scmp.eq.s32.totalorder %s24, 0
      %p171 = por %p169, %p170
      %p172 = scmp.ne.s32.totalorder %s160, %s161
      %p173 = scmp.eq.s32.totalorder %s25, 1
      %p174 = por %p172, %p173
      %p176 = scmp.ne.s32.totalorder %s161, %s175
      %p177 = scmp.eq.s32.totalorder %s25, 0
      %p178 = por %p176, %p177
      %s179 = ssub.s32 %s19, %s26
      %p180 = scmp.eq.s32.totalorder %s179, 0
      %s182 = sadd.s32 %s181, 1
      %s183 = scalar_select %p180, %s181, %s182
      %p186 = pneg %p180
      %p187 = scmp.eq.s32.totalorder %s19, 1
      %p188 = por %p186, %p187
      %p189 = scmp.ne.s32.totalorder %s181, %s184
      %p190 = scmp.eq.s32.totalorder %s19, 0
      %p191 = por %p189, %p190
      %p192 = scmp.ne.s32.totalorder %s181, %s184
      %p193 = scmp.eq.s32.totalorder %s24, 1
      %p194 = por %p192, %p193
      %p195 = scmp.ne.s32.totalorder %s184, %s185
      %p196 = scmp.eq.s32.totalorder %s24, 0
      %p197 = por %p195, %p196
      %p198 = scmp.ne.s32.totalorder %s184, %s185
      %p199 = scmp.eq.s32.totalorder %s25, 1
      %p200 = por %p198, %p199
      %p202 = scmp.ne.s32.totalorder %s185, %s201
      %p203 = scmp.eq.s32.totalorder %s25, 0
      %p204 = por %p202, %p203
      %p205 = scmp.le.s32.totalorder 1, %s19
      %p206 = scmp.lt.s32.totalorder %s19, 3
      %p207 = pnand %p205, %p206
      %p208 = pneg %p207
      // Predicated region
      $region9: #{tpu_custom_call.1} parent=5 // pred_check
        _
      $region10: #{tpu_custom_call.1} parent=5 // pred_check_branch
        %210 = sbr.rel (%p207) target = $region12
      $region11: #{tpu_custom_call.1} parent=5 // pred_region
        %s211 = ssub.s32 %s19, 1
        // Predicated region
        $region13: #{tpu_custom_call.1} parent=11 // pred_check
          %p212 = pneg %p66
        $region14: #{tpu_custom_call.1} parent=11 // pred_check_branch
          %214 = sbr.rel (%p212) target = $region16
        $region15: #{tpu_custom_call.1} parent=11 // pred_region
          _
        $region16: #{tpu_custom_call.1} parent=11 // pred_fallthru
          _
        // Predicated region
        $region17: #{tpu_custom_call.1} parent=11 // pred_check
          %p215 = pneg %p87
        $region18: #{tpu_custom_call.1} parent=11 // pred_check_branch
          %217 = sbr.rel (%p215) target = $region20
        $region19: #{tpu_custom_call.1} parent=11 // pred_region
          _
        $region20: #{tpu_custom_call.1} parent=11 // pred_fallthru
          _
        // Predicated region
        $region21: #{tpu_custom_call.1} parent=11 // pred_check
          %p218 = pneg %p108
        $region22: #{tpu_custom_call.1} parent=11 // pred_check_branch
          %220 = sbr.rel (%p218) target = $region24
        $region23: #{tpu_custom_call.1} parent=11 // pred_region
          _
        $region24: #{tpu_custom_call.1} parent=11 // pred_fallthru
          _
        // Predicated region
        $region25: #{tpu_custom_call.1} parent=11 // pred_check
          %p221 = pneg %p129
        $region26: #{tpu_custom_call.1} parent=11 // pred_check_branch
          %223 = sbr.rel (%p221) target = $region28
        $region27: #{tpu_custom_call.1} parent=11 // pred_region
          _
        $region28: #{tpu_custom_call.1} parent=11 // pred_fallthru
          _
        // Predicated region
        $region29: #{tpu_custom_call.1} parent=11 // pred_check
          %p224 = pneg %p150
        $region30: #{tpu_custom_call.1} parent=11 // pred_check_branch
          %226 = sbr.rel (%p224) target = $region32
        $region31: #{tpu_custom_call.1} parent=11 // pred_region
          _
        $region32: #{tpu_custom_call.1} parent=11 // pred_fallthru
          _
        // Predicated region
        $region33: #{tpu_custom_call.1} parent=11 // pred_check
          %p227 = pneg %p171
        $region34: #{tpu_custom_call.1} parent=11 // pred_check_branch
          %229 = sbr.rel (%p227) target = $region36
        $region35: #{tpu_custom_call.1} parent=11 // pred_region
          _
        $region36: #{tpu_custom_call.1} parent=11 // pred_fallthru
          _
      $region12: #{tpu_custom_call.1} parent=5 // pred_fallthru
        _
      %p230 = scmp.lt.s32.totalorder %s19, 2
      // Predicated region
      $region37: #{tpu_custom_call.1} parent=5 // pred_check
        %p231 = pneg %p230
      $region38: #{tpu_custom_call.1} parent=5 // pred_check_branch
        %233 = sbr.rel (%p231) target = $region40
      $region39: #{tpu_custom_call.1} parent=5 // pred_region
        // Predicated region
        $region41: #{tpu_custom_call.1} parent=39 // pred_check
          %p234 = pneg %p39
        $region42: #{tpu_custom_call.1} parent=39 // pred_check_branch
          %236 = sbr.rel (%p234) target = $region44
        $region43: #{tpu_custom_call.1} parent=39 // pred_region
          %s237 = sand.u32 %s29, 1
          %s238 = scalar_lea.sflag [#allocation3], %s237
          %s239 = sand.u32 %s29, 1
          %s240 = smul.addr %s239, 8
          %s241 = scalar_lea.vmem [#allocation2], %s240
          %243 = vsyncadd %s238, 0
          %s244 = smul.addr %s19, 8
          %s245 = scalar_lea.hbm %s0, %s244
          %s247 = sshll.u32 %s245, 4
          %s248 = int_to_ptr.hbm [resolvable:$true] %s247
          %s249 = sshll.u32 %s241, 4
          %s250 = int_to_ptr.vmem [resolvable:$true] %s249
          %252 = dma.hbm_to_vmem [thread:$0]  %s248, 128, %s250, %s238
        $region44: #{tpu_custom_call.1} parent=39 // pred_fallthru
          _
      $region40: #{tpu_custom_call.1} parent=5 // pred_fallthru
        _
      %p253 = scmp.le.s32.totalorder 1, %s19
      %p254 = scmp.lt.s32.totalorder %s19, 3
      %p255 = pnand %p253, %p254
      %p256 = pneg %p255
      // Predicated region
      $region45: #{tpu_custom_call.1} parent=5 // pred_check
        _
      $region46: #{tpu_custom_call.1} parent=5 // pred_check_branch
        %258 = sbr.rel (%p255) target = $region48
      $region47: #{tpu_custom_call.1} parent=5 // pred_region
        %s259 = ssub.s32 %s19, 1
        %s260 = sand.u32 %s32, 1
        %s261 = scalar_lea.sflag [#allocation3], %s260
        %s262 = sand.u32 %s32, 1
        %s263 = smul.addr %s262, 8
        %s264 = scalar_lea.vmem [#allocation2], %s263
        // Predicated region
        $region49: #{tpu_custom_call.1} parent=47 // pred_check
          %p265 = pneg %p45
        $region50: #{tpu_custom_call.1} parent=47 // pred_check_branch
          %267 = sbr.rel (%p265) target = $region52
        $region51: #{tpu_custom_call.1} parent=47 // pred_region
          %269 = dma.done %s261, 128
        $region52: #{tpu_custom_call.1} parent=47 // pred_fallthru
          _
        %s270 = sand.u32 %s32, 1
        %s271 = scalar_lea.sflag [#allocation3], %s270
        %s272 = sand.u32 %s32, 1
        %s273 = smul.addr %s272, 8
        %s274 = scalar_lea.vmem [#allocation2], %s273
        %p275 = pneg %p45
        %p276 = pneg %p42
        %p277 = pneg %p66
        %p278 = pneg %p63
        %p279 = pneg %p87
        %p280 = pneg %p84
        %p281 = pneg %p108
        %p282 = pneg %p105
        %p283 = pneg %p129
        %p284 = pneg %p126
        %p285 = pneg %p150
        %p286 = pneg %p147
        %p287 = pneg %p171
        %p288 = pneg %p168
        %p289 = pneg %p197
        %p290 = pneg %p194
        %s291 = sand.u32 %s184, 1
        %s292 = scalar_lea.sflag [#allocation4], %s291
        %s293 = sand.u32 %s184, 1
        %s294 = smul.addr %s293, 8
        %s295 = scalar_lea.vmem [#allocation5], %s294
        %v296 = vld [vmem:[%s264] sm:$0xff]
        %v297 = vld [vmem:[%s1] sm:$0xff]
        %v298 = vld [vmem:[%s1 + $0x8] sm:$0xff]
        %v299 = vld [vmem:[%s1 + $0x10] sm:$0xff]
        %v300 = vld [vmem:[%s1 + $0x18] sm:$0xff]
        %v301 = vld [vmem:[%s2] sm:$0x1]
        %v303 = vperm.slane %v301, 0
        %vm305 = vcmask 261120
        %v307 = vsel %vm305, %v296, 0
        %309 = vmatpush.msra.mxu0 0.0
        %310 = vmatpush.msra.mxu0 0.0
        %311 = vmatpush.msra.mxu0 0.0
        %312 = vmatpush.msra.mxu0 0.0
        %313 = vmatpush.msra.mxu0 0.0
        %314 = vmatpush.msra.mxu0 0.0
        %315 = vmatpush.msra.mxu0 0.0
        %316 = vmatpush.msra.mxu0 0.0
        %317 = vmatpush.msra.mxu0 0.0
        %318 = vmatpush.msra.mxu0 0.0
        %319 = vmatpush.msra.mxu0 0.0
        %320 = vmatpush.msra.mxu0 0.0
        %321 = vmatpush.msra.mxu0 %v300
        %322 = vmatpush.msra.mxu0 %v299
        %323 = vmatpush.msra.mxu0 %v298
        %324 = vmatpush.msra.mxu0 %v297
        %325 = vmatmul.f32.gmra.mxu0 %v307
        %v326 = vpop.f32.mrf.mxu0
        %v327 = vadd.f32 %v303, %v326
        %328 = vdwg.mxu0
        %v329 = vmul.f32 %v327, 0.5
        %v330 = vmul.f32 %v327, 0.044715
        %v331 = vmul.f32 %v330, %v327
        %v332 = vmul.f32 %v331, %v327
        %v333 = vadd.f32 %v327, %v332
        %v334 = vmul.f32 %v333, 0.7978846
        %v335 = vtanh.pop %v334
        %v336 = vadd.f32 %v335, 1.0
        %v337 = vmul.f32 %v329, %v336
        %v338 = vld [vmem:[%s3] sm:$0xff]
        %v339 = vld [vmem:[%s3 + $0x8] sm:$0xff]
        %v340 = vld [vmem:[%s3 + $0x10] sm:$0xff]
        %v341 = vld [vmem:[%s3 + $0x18] sm:$0xff]
        %v342 = vld [vmem:[%s3 + $0x20] sm:$0xff]
        %v343 = vld [vmem:[%s3 + $0x28] sm:$0xff]
        %v344 = vld [vmem:[%s3 + $0x30] sm:$0xff]
        %v345 = vld [vmem:[%s3 + $0x38] sm:$0xff]
        %v346 = vld [vmem:[%s4] sm:$0x1]
        %v348 = vperm.slane %v346, 0
        %vm350 = vcmask 523264
        %v352 = vsel %vm350, %v337, 0
        %354 = vmatpush.msra.mxu0 0.0
        %355 = vmatpush.msra.mxu0 0.0
        %356 = vmatpush.msra.mxu0 0.0
        %357 = vmatpush.msra.mxu0 0.0
        %358 = vmatpush.msra.mxu0 0.0
        %359 = vmatpush.msra.mxu0 0.0
        %360 = vmatpush.msra.mxu0 0.0
        %361 = vmatpush.msra.mxu0 0.0
        %362 = vmatpush.msra.mxu0 %v345
        %363 = vmatpush.msra.mxu0 %v344
        %364 = vmatpush.msra.mxu0 %v343
        %365 = vmatpush.msra.mxu0 %v342
        %366 = vmatpush.msra.mxu0 %v341
        %367 = vmatpush.msra.mxu0 %v340
        %368 = vmatpush.msra.mxu0 %v339
        %369 = vmatpush.msra.mxu0 %v338
        %370 = vmatmul.f32.gmra.mxu0 %v352
        %v371 = vpop.f32.mrf.mxu0
        %v372 = vadd.f32 %v348, %v371
        %373 = vdwg.mxu0
        %v374 = vmul.f32 %v372, 0.5
        %v375 = vmul.f32 %v372, 0.044715
        %v376 = vmul.f32 %v375, %v372
        %v377 = vmul.f32 %v376, %v372
        %v378 = vadd.f32 %v372, %v377
        %v379 = vmul.f32 %v378, 0.7978846
        %v380 = vtanh.pop %v379
        %v381 = vadd.f32 %v380, 1.0
        %v382 = vmul.f32 %v374, %v381
        %v383 = vld [vmem:[%s5] sm:$0xff]
        %v384 = vld [vmem:[%s5 + $0x8] sm:$0xff]
        %v385 = vld [vmem:[%s5 + $0x10] sm:$0xff]
        %v386 = vld [vmem:[%s5 + $0x18] sm:$0xff]
        %v387 = vld [vmem:[%s5 + $0x20] sm:$0xff]
        %v388 = vld [vmem:[%s5 + $0x28] sm:$0xff]
        %v389 = vld [vmem:[%s5 + $0x30] sm:$0xff]
        %v390 = vld [vmem:[%s5 + $0x38] sm:$0xff]
        %v391 = vld [vmem:[%s6] sm:$0x1]
        %v393 = vperm.slane %v391, 0
        %v396 = vsel %vm350, %v382, 0
        %398 = vmatpush.msra.mxu0 0.0
        %399 = vmatpush.msra.mxu0 0.0
        %400 = vmatpush.msra.mxu0 0.0
        %401 = vmatpush.msra.mxu0 0.0
        %402 = vmatpush.msra.mxu0 0.0
        %403 = vmatpush.msra.mxu0 0.0
        %404 = vmatpush.msra.mxu0 0.0
        %405 = vmatpush.msra.mxu0 0.0
        %406 = vmatpush.msra.mxu0 %v390
        %407 = vmatpush.msra.mxu0 %v389
        %408 = vmatpush.msra.mxu0 %v388
        %409 = vmatpush.msra.mxu0 %v387
        %410 = vmatpush.msra.mxu0 %v386
        %411 = vmatpush.msra.mxu0 %v385
        %412 = vmatpush.msra.mxu0 %v384
        %413 = vmatpush.msra.mxu0 %v383
        %414 = vmatmul.f32.gmra.mxu0 %v396
        %v415 = vpop.f32.mrf.mxu0
        %v416 = vadd.f32 %v393, %v415
        %417 = vdwg.mxu0
        %418 = vst.msk [vmem:[%s295] sm:$0xff] %vm305, %v416
        %s419 = sand.u32 %s184, 1
        %s420 = scalar_lea.sflag [#allocation4], %s419
        %s421 = sand.u32 %s184, 1
        %s422 = smul.addr %s421, 8
        %s423 = scalar_lea.vmem [#allocation5], %s422
        // Predicated region
        $region53: #{tpu_custom_call.1} parent=47 // pred_check
          %p424 = pneg %p194
        $region54: #{tpu_custom_call.1} parent=47 // pred_check_branch
          %426 = sbr.rel (%p424) target = $region56
        $region55: #{tpu_custom_call.1} parent=47 // pred_region
          %428 = vsyncadd %s420, 0
          %s429 = smul.addr %s24, 8
          %s430 = scalar_lea.hbm %s7, %s429
          %s432 = sshll.u32 %s423, 4
          %s433 = int_to_ptr.vmem [resolvable:$true] %s432
          %s434 = sshll.u32 %s430, 4
          %s435 = int_to_ptr.hbm [resolvable:$true] %s434
          %437 = dma.vmem_to_hbm [thread:$0]  %s433, 128, %s435, %s420
        $region56: #{tpu_custom_call.1} parent=47 // pred_fallthru
          _
      $region48: #{tpu_custom_call.1} parent=5 // pred_fallthru
        _
      %p438 = scmp.le.s32.totalorder 2, %s19
      // Predicated region
      $region57: #{tpu_custom_call.1} parent=5 // pred_check
        %p439 = pneg %p438
      $region58: #{tpu_custom_call.1} parent=5 // pred_check_branch
        %441 = sbr.rel (%p439) target = $region60
      $region59: #{tpu_custom_call.1} parent=5 // pred_region
        %s442 = ssub.s32 %s19, 2
        // Predicated region
        $region61: #{tpu_custom_call.1} parent=59 // pred_check
          %p443 = pneg %p200
        $region62: #{tpu_custom_call.1} parent=59 // pred_check_branch
          %445 = sbr.rel (%p443) target = $region64
        $region63: #{tpu_custom_call.1} parent=59 // pred_region
          %s446 = sand.u32 %s185, 1
          %s447 = scalar_lea.sflag [#allocation4], %s446
          %s448 = sand.u32 %s185, 1
          %s449 = smul.addr %s448, 8
          %s450 = scalar_lea.vmem [#allocation5], %s449
          %452 = dma.done %s447, 128
        $region64: #{tpu_custom_call.1} parent=59 // pred_fallthru
          _
      $region60: #{tpu_custom_call.1} parent=5 // pred_fallthru
        _
    $region6: #{tpu_custom_call.1} parent=1 // loop_footer
      %s23 = sadd.s32 1, %s19
    $region7: #{tpu_custom_call.1} parent=1 // loop_footer_branch
      %18 = sbr.rel target = $region3
    $region8: #{tpu_custom_call.1} parent=1 // loop_exit
      _
    %453 = vsyncpa [#allocation3], 1
    %s454 = scalar_lea.sflag [#allocation3], 1
    %455 = vsyncpa %s454, 1
    %456 = vsyncpa [#allocation4], 1
    %s457 = scalar_lea.sflag [#allocation4], 1
    %458 = vsyncpa %s457, 1

</llo_original>
